<compile_context>
chip_gen: v7x
topology: tpu7x:2x2x1
jax: 0.10.0
libtpu: 0.0.40
codegen_flags: <defaults>
</compile_context>

<pallas_src>
import jax
import jax.numpy as jnp
from jax.experimental import pallas as pl
from jax.experimental.pallas import tpu as pltpu


def _round_up(x: int, m: int) -> int:
    return (x + m - 1) // m * m


def _cdiv(a: int, b: int) -> int:
    return -(-a // b)


def _vmem_budget_bytes() -> int:
    """VMEM budget with headroom: ~51 MiB on v7x (64 MiB), ~102 MiB on v5e/v6e."""
    try:
        cap = pltpu.get_tpu_info().vmem_capacity_bytes
    except Exception:  # pragma: no cover - e.g. interpret mode
        cap = 64 * 1024 * 1024
    return max(32 * 1024 * 1024, min(int(cap * 0.8), 112 * 1024 * 1024))


def _single_buffered_spec(block_shape, index_map):
    # Constant-index operand: double-buffering it is pure VMEM waste.
    try:
        return pl.BlockSpec(block_shape, index_map, pipeline_mode=pl.Buffered(1))
    except TypeError:  # older BlockSpec signature without pipeline_mode
        return pl.BlockSpec(block_shape, index_map)


# --------------------------------------------------------------------------- #
# Kernels
# --------------------------------------------------------------------------- #
def captioning_head_kernel(x_ref, w1_ref, b1_ref, w2_ref, b2_ref, o_ref, h_ref):
    # x_ref:  (TM, C)   row tile of flattened features (compute dtype)
    # w1_ref: (C, H)    dense weight, resident (single-buffered)
    # b1_ref: (1, H)    dense bias (f32), resident (single-buffered)
    # w2_ref: (H, TN)   out_proj weight tile (vocab-tiled, streamed)
    # b2_ref: (1, TN)   out_proj bias tile (f32)
    # o_ref:  (TM, TN)  logits tile
    # h_ref:  (TM, H)   VMEM scratch caching the hidden activations
    #
    # The vocab axis is the inner, sequentially-iterated ("arbitrary") axis, so
    # computing h at vocab-tile 0 makes it valid for the whole row tile.
    @pl.when(pl.program_id(1) == 0)
    def _():
        h = jnp.dot(x_ref[...], w1_ref[...],
                    preferred_element_type=jnp.float32)
        h_ref[...] = (h + b1_ref[...]).astype(h_ref.dtype)

    logits = jnp.dot(h_ref[...], w2_ref[...],
                     preferred_element_type=jnp.float32)
    o_ref[...] = (logits + b2_ref[...]).astype(o_ref.dtype)


def _hidden_kernel(x_ref, w1_ref, b1_ref, h_ref):
    # Whole-array blocks (only used for the small-M decode path).
    h = jnp.dot(x_ref[...], w1_ref[...], preferred_element_type=jnp.float32)
    h_ref[...] = (h + b1_ref[...]).astype(h_ref.dtype)


def _proj_kernel(h_ref, w2_ref, b2_ref, o_ref):
    logits = jnp.dot(h_ref[...], w2_ref[...], preferred_element_type=jnp.float32)
    o_ref[...] = (logits + b2_ref[...]).astype(o_ref.dtype)


# --------------------------------------------------------------------------- #
# Wrapper
# --------------------------------------------------------------------------- #
def captioning_head(features, w1, b1, w2, b2, *, tm_max=512, tn_max=1024,
                    compute_dtype=jnp.bfloat16, out_dtype=None):
    """features: [B, S, C].  w1:(C,H) b1:(H,) w2:(H,V) b2:(V,).

    tm_max / tn_max: upper bounds on the row / vocab tiles; actual tiles are
      derived from the chip's VMEM budget and the problem size.
    compute_dtype: matmul input dtype (bf16 recommended on v6e/v7x); all
      accumulation is f32 via preferred_element_type.
    out_dtype: logits dtype (default features.dtype; pass bf16 to halve the
      logits HBM stream when downstream accepts it).
    """
    B, S, C = features.shape
    H = w1.shape[1]
    V = w2.shape[1]
    M = B * S
    if out_dtype is None:
        out_dtype = features.dtype

    comp_isz = jnp.dtype(compute_dtype).itemsize
    out_isz = jnp.dtype(out_dtype).itemsize
    align = 16 if comp_isz < 4 else 8   # full sublane packing for bf16

    # ---- Tile selection ---------------------------------------------------
    # Vocab tile: lane-dense multiple of 128, spread over the minimal number of
    # tiles so padding waste is < 128 columns.
    tn = min(tn_max, _round_up(V, 128))
    tn = _round_up(_cdiv(V, _cdiv(V, tn)), 128)
    # Row tile: spread M over the minimal number of <= tm_max tiles so padding
    # waste is < one alignment group (avoids up to ~2x wasted work).
    tm = _round_up(_cdiv(M, _cdiv(M, tm_max)), align)
    tm = max(align, min(tm, _round_up(M, align)))

    budget = _vmem_budget_bytes()

    def resident_bytes(tm_, tn_):
        # 2x x tile + 1x W1/b1 (single-buffered) + 2x W2/b2 tile
        # + 2x out tile + h scratch.
        return (2 * tm_ * C * comp_isz
                + C * H * comp_isz + H * 4
                + 2 * H * tn_ * comp_isz + 2 * tn_ * 4
                + 2 * tm_ * tn_ * out_isz
                + tm_ * H * comp_isz)

    while resident_bytes(tm, tn) > budget and tn > 512:
        tn = max(512, _round_up(tn // 2, 128))
    while resident_bytes(tm, tn) > budget and tm > align:
        tm = max(align, _round_up(tm // 2, align))

    M_pad = _round_up(M, tm)
    V_pad = _round_up(V, tn)
    n_row_tiles = M_pad // tm
    n_vocab_tiles = V_pad // tn

    # ---- Operand preparation ------------------------------------------------
    x2d = features.reshape(M, C).astype(compute_dtype)
    if M_pad != M:
        x2d = jnp.pad(x2d, ((0, M_pad - M), (0, 0)))
    w1c = w1.astype(compute_dtype)
    w2c = w2.astype(compute_dtype)
    b1_2d = b1.reshape(1, H).astype(jnp.float32)
    b2_2d = b2.reshape(1, V).astype(jnp.float32)
    if V_pad != V:
        w2c = jnp.pad(w2c, ((0, 0), (0, V_pad - V)))
        b2_2d = jnp.pad(b2_2d, ((0, 0), (0, V_pad - V)))

    vmem_limit = budget

    # ---- Decode-style path: one row tile, several vocab tiles ---------------
    # Precompute h once, then run a vocab-"parallel" projection so both v7x
    # TensorCores split the vocab tiles (no h-cache dependency on the grid).
    if n_row_tiles == 1 and n_vocab_tiles > 1:
        h = pl.pallas_call(
            _hidden_kernel,
            out_shape=jax.ShapeDtypeStruct((M_pad, H), compute_dtype),
            compiler_params=pltpu.CompilerParams(
                vmem_limit_bytes=vmem_limit),
        )(x2d, w1c, b1_2d)

        proj_cost = pl.CostEstimate(
            flops=2 * M_pad * H * V_pad,
            transcendentals=0,
            bytes_accessed=(M_pad * H * comp_isz          # h (resident)
                            + H * V_pad * comp_isz        # W2 streamed once
                            + V_pad * 4                   # b2
                            + M_pad * V_pad * out_isz))   # logits

        out2d = pl.pallas_call(
            _proj_kernel,
            out_shape=jax.ShapeDtypeStruct((M_pad, V_pad), out_dtype),
            grid_spec=pltpu.PrefetchScalarGridSpec(
                num_scalar_prefetch=0,
                grid=(n_vocab_tiles,),
                in_specs=[
                    _single_buffered_spec((M_pad, H), lambda j: (0, 0)),
                    pl.BlockSpec((H, tn), lambda j: (0, j)),
                    pl.BlockSpec((1, tn), lambda j: (0, j)),
                ],
                out_specs=pl.BlockSpec((M_pad, tn), lambda j: (0, j)),
            ),
            compiler_params=pltpu.CompilerParams(
                dimension_semantics=("parallel",),
                vmem_limit_bytes=vmem_limit),
            cost_estimate=proj_cost,
        )(h, w2c, b2_2d)
        return out2d[:M, :V].reshape(B, S, V)

    # ---- Fused path: rows "parallel" (outer) x vocab "arbitrary" (inner) ----
    cost = pl.CostEstimate(
        flops=2 * M_pad * C * H + 2 * M_pad * H * V_pad,
        transcendentals=0,
        bytes_accessed=(M_pad * C * comp_isz              # x
                        + C * H * comp_isz + H * 4        # W1, b1 (resident)
                        + n_row_tiles * (H * V_pad * comp_isz   # W2 re-streamed
                                         + V_pad * 4)           # b2 re-streamed
                        + M_pad * V_pad * out_isz))       # logits

    out2d = pl.pallas_call(
        captioning_head_kernel,
        out_shape=jax.ShapeDtypeStruct((M_pad, V_pad), out_dtype),
        grid_spec=pltpu.PrefetchScalarGridSpec(
            num_scalar_prefetch=0,
            grid=(n_row_tiles, n_vocab_tiles),
            in_specs=[
                pl.BlockSpec((tm, C), lambda i, j: (i, 0)),        # x row tile
                _single_buffered_spec((C, H), lambda i, j: (0, 0)),  # W1
                _single_buffered_spec((1, H), lambda i, j: (0, 0)),  # b1
                pl.BlockSpec((H, tn), lambda i, j: (0, j)),        # W2 tile
                pl.BlockSpec((1, tn), lambda i, j: (0, j)),        # b2 tile
            ],
            out_specs=pl.BlockSpec((tm, tn), lambda i, j: (i, j)),
            scratch_shapes=[pltpu.VMEM((tm, H), compute_dtype)],
        ),
        compiler_params=pltpu.CompilerParams(
            dimension_semantics=("parallel", "arbitrary"),
            vmem_limit_bytes=vmem_limit),
        cost_estimate=cost,
    )(x2d, w1c, b1_2d, w2c, b2_2d)

    return out2d[:M, :V].reshape(B, S, V)


# --------------------------------------------------------------------------- #
# Self-test
# --------------------------------------------------------------------------- #
if __name__ == "__main__":
    key = jax.random.PRNGKey(0)

    def make_params(k, C, H, V):
        k_w1, k_b1, k_w2, k_b2 = jax.random.split(k, 4)
        lim1 = 1.0 / C ** 0.5
        lim2 = 1.0 / H ** 0.5
        w1 = jax.random.uniform(k_w1, (C, H), jnp.float32, -lim1, lim1)
        b1 = jax.random.uniform(k_b1, (H,), jnp.float32, -lim1, lim1)
        w2 = jax.random.uniform(k_w2, (H, V), jnp.float32, -lim2, lim2)
        b2 = jax.random.uniform(k_b2, (V,), jnp.float32, -lim2, lim2)
        return w1, b1, w2, b2

    def reference(feats, w1, b1, w2, b2):
        Bb, Ss, Cc = feats.shape
        h = feats.reshape(-1, Cc) @ w1 + b1
        return (h @ w2 + b2).reshape(Bb, Ss, -1)

    # --- Case 1: module-default small shapes (fused path, grid (1,1)) -------
    B, S, C, H, V = 2, 8, 32, 32, 128
    k0, k1, key = jax.random.split(key, 3)
    feats = jax.random.normal(k0, (B, S, C), jnp.float32)
    w1, b1, w2, b2 = make_params(k1, C, H, V)
    ref = reference(feats, w1, b1, w2, b2)

    out_f32 = jax.block_until_ready(
        captioning_head(feats, w1, b1, w2, b2, compute_dtype=jnp.float32))
    assert out_f32.shape == (B, S, V) and out_f32.dtype == jnp.float32
    assert jnp.allclose(out_f32, ref, atol=1e-4, rtol=1e-4)

    out_bf16 = jax.block_until_ready(
        captioning_head(feats, w1, b1, w2, b2, compute_dtype=jnp.bfloat16))
    assert jnp.allclose(out_bf16, ref, atol=5e-2, rtol=5e-2)

    out_lo = jax.block_until_ready(
        captioning_head(feats, w1, b1, w2, b2, compute_dtype=jnp.bfloat16,
                        out_dtype=jnp.bfloat16))
    assert out_lo.dtype == jnp.bfloat16
    assert jnp.allclose(out_lo.astype(jnp.float32), ref, atol=1e-1, rtol=1e-1)

    # --- Case 2: multi row tile x multi vocab tile (h-cache reuse path) -----
    B, S, C, H, V = 4, 64, 32, 32, 256
    k0, k1, key = jax.random.split(key, 3)
    feats = jax.random.normal(k0, (B, S, C), jnp.float32)
    w1, b1, w2, b2 = make_params(k1, C, H, V)
    ref = reference(feats, w1, b1, w2, b2)
    out = jax.block_until_ready(
        captioning_head(feats, w1, b1, w2, b2, tm_max=128, tn_max=128,
                        compute_dtype=jnp.float32))
    assert jnp.allclose(out, ref, atol=1e-4, rtol=1e-4)

    # --- Case 3: decode-style (1 row tile, many vocab tiles) split path -----
    B, S, C, H, V = 2, 8, 32, 32, 512
    k0, k1, key = jax.random.split(key, 3)
    feats = jax.random.normal(k0, (B, S, C), jnp.float32)
    w1, b1, w2, b2 = make_params(k1, C, H, V)
    ref = reference(feats, w1, b1, w2, b2)
    out = jax.block_until_ready(
        captioning_head(feats, w1, b1, w2, b2, tn_max=128,
                        compute_dtype=jnp.float32))
    assert jnp.allclose(out, ref, atol=1e-4, rtol=1e-4)

    print("KERNEL_OK")
</pallas_src>

<mosaic_0001>
module attributes {stable_mosaic.version = 11 : i64} {
  func.func @captioning_head_kernel(%arg0: i32, %arg1: i32, %arg2: memref<16x32xf32, #tpu.memory_space<vmem>>, %arg3: memref<32x32xf32, #tpu.memory_space<vmem>>, %arg4: memref<1x32xf32, #tpu.memory_space<vmem>>, %arg5: memref<32x128xf32, #tpu.memory_space<vmem>>, %arg6: memref<1x128xf32, #tpu.memory_space<vmem>>, %arg7: memref<16x128xf32, #tpu.memory_space<vmem>>, %arg8: memref<16x32xf32, #tpu.memory_space<vmem>>) attributes {dimension_semantics = [#tpu.dimension_semantics<parallel>, #tpu.dimension_semantics<arbitrary>], iteration_bounds = array<i64: 1, 1>, scalar_prefetch = 0 : i64, scratch_operands = 1 : i64, tpu.core_type = #tpu.core_type<tc>, window_params = [{transform_indices = @transform_0, window_bounds = array<i64: 16, 32>}, {pipeline_mode = #tpu.pipeline_mode<synchronous>, transform_indices = @transform_1, window_bounds = array<i64: 32, 32>}, {pipeline_mode = #tpu.pipeline_mode<synchronous>, transform_indices = @transform_2, window_bounds = array<i64: 1, 32>}, {transform_indices = @transform_3, window_bounds = array<i64: 32, 128>}, {transform_indices = @transform_4, window_bounds = array<i64: 1, 128>}, {transform_indices = @transform_5, window_bounds = array<i64: 16, 128>}]} {
    %c0_i32 = arith.constant 0 : i32
    %0 = arith.cmpi eq, %arg1, %c0_i32 : i32
    %1 = arith.extui %0 : i1 to i32
    %c0_i32_0 = arith.constant 0 : i32
    %2 = arith.cmpi ne, %1, %c0_i32_0 : i32
    scf.if %2 {
      %c0_8 = arith.constant 0 : index
      %c0_9 = arith.constant 0 : index
      %10 = vector.load %arg2[%c0_8, %c0_9] : memref<16x32xf32, #tpu.memory_space<vmem>>, vector<16x32xf32>
      %c0_10 = arith.constant 0 : index
      %c0_11 = arith.constant 0 : index
      %11 = vector.load %arg3[%c0_10, %c0_11] : memref<32x32xf32, #tpu.memory_space<vmem>>, vector<32x32xf32>
      %cst_12 = arith.constant dense<0.000000e+00> : vector<16x32xf32>
      %12 = tpu.matmul %10, %11, %cst_12 {dimension_numbers = #tpu.dot_dimension_numbers<[1], [0], [0], [1], [0, 0, 1, 1], [], []>} : vector<16x32xf32>, vector<32x32xf32>, vector<16x32xf32> -> vector<16x32xf32>
      %c0_13 = arith.constant 0 : index
      %c0_14 = arith.constant 0 : index
      %13 = vector.load %arg4[%c0_13, %c0_14] : memref<1x32xf32, #tpu.memory_space<vmem>>, vector<1x32xf32>
      %14 = vector.broadcast %13 : vector<1x32xf32> to vector<16x32xf32>
      %15 = arith.addf %12, %14 : vector<16x32xf32>
      %c0_15 = arith.constant 0 : index
      %c0_16 = arith.constant 0 : index
      %16 = vector.load %arg8[%c0_15, %c0_16] : memref<16x32xf32, #tpu.memory_space<vmem>>, vector<16x32xf32>
      tpu.vector_store %arg8[%c0_15, %c0_16], %15 {strides = array<i32>} : memref<16x32xf32, #tpu.memory_space<vmem>>, vector<16x32xf32>,
    } else {
    }
    %c0 = arith.constant 0 : index
    %c0_1 = arith.constant 0 : index
    %3 = vector.load %arg8[%c0, %c0_1] : memref<16x32xf32, #tpu.memory_space<vmem>>, vector<16x32xf32>
    %c0_2 = arith.constant 0 : index
    %c0_3 = arith.constant 0 : index
    %4 = vector.load %arg5[%c0_2, %c0_3] : memref<32x128xf32, #tpu.memory_space<vmem>>, vector<32x128xf32>
    %cst = arith.constant dense<0.000000e+00> : vector<16x128xf32>
    %5 = tpu.matmul %3, %4, %cst {dimension_numbers = #tpu.dot_dimension_numbers<[1], [0], [0], [1], [0, 0, 1, 1], [], []>} : vector<16x32xf32>, vector<32x128xf32>, vector<16x128xf32> -> vector<16x128xf32>
    %c0_4 = arith.constant 0 : index
    %c0_5 = arith.constant 0 : index
    %6 = vector.load %arg6[%c0_4, %c0_5] : memref<1x128xf32, #tpu.memory_space<vmem>>, vector<1x128xf32>
    %7 = vector.broadcast %6 : vector<1x128xf32> to vector<16x128xf32>
    %8 = arith.addf %5, %7 : vector<16x128xf32>
    %c0_6 = arith.constant 0 : index
    %c0_7 = arith.constant 0 : index
    %9 = vector.load %arg7[%c0_6, %c0_7] : memref<16x128xf32, #tpu.memory_space<vmem>>, vector<16x128xf32>
    tpu.vector_store %arg7[%c0_6, %c0_7], %8 {strides = array<i32>} : memref<16x128xf32, #tpu.memory_space<vmem>>, vector<16x128xf32>,
    return
  }
  func.func @transform_0(%arg0: i32, %arg1: i32) -> (i32, i32) {
    %c0_i32 = arith.constant 0 : i32
    %c0_i32_0 = arith.constant 0 : i32
    return %arg0, %c0_i32 : i32, i32
  }
  func.func @transform_1(%arg0: i32, %arg1: i32) -> (i32, i32) {
    %c0_i32 = arith.constant 0 : i32
    %c0_i32_0 = arith.constant 0 : i32
    %c0_i32_1 = arith.constant 0 : i32
    return %c0_i32, %c0_i32_0 : i32, i32
  }
  func.func @transform_2(%arg0: i32, %arg1: i32) -> (i32, i32) {
    %c0_i32 = arith.constant 0 : i32
    %c0_i32_0 = arith.constant 0 : i32
    %c0_i32_1 = arith.constant 0 : i32
    return %c0_i32, %c0_i32_0 : i32, i32
  }
  func.func @transform_3(%arg0: i32, %arg1: i32) -> (i32, i32) {
    %c0_i32 = arith.constant 0 : i32
    %c0_i32_0 = arith.constant 0 : i32
    return %c0_i32, %arg1 : i32, i32
  }
  func.func @transform_4(%arg0: i32, %arg1: i32) -> (i32, i32) {
    %c0_i32 = arith.constant 0 : i32
    %c0_i32_0 = arith.constant 0 : i32
    return %c0_i32, %arg1 : i32, i32
  }
  func.func @transform_5(%arg0: i32, %arg1: i32) -> (i32, i32) {
    %c0_i32 = arith.constant 0 : i32
    return %arg0, %arg1 : i32, i32
  }
}

</mosaic_0001>

<llo_original>
// kernel: tpu_custom_call.1
$region0: #{tpu_custom_call.1}
  #allocation0 [shape = 'u32[]', space=smem, size = 0x4, offset = 0x4, fixed_abs, tag = 'smem constant byte address 0x4 - core index']
  #allocation1 [shape = 'u32[144,128]{1,0:T(1,128)}', space=vmem, size = 0x12000, scoped, tag = 'internal scratch']
  #allocation2 [shape = 'f32[16,32]{1,0:T(8,128)}', space=vmem, size = 0x2000, scoped, tag = 'scratch operand']
  %s0 = inlined_call_operand.hbm [shape: f32[16,32], index: 0, kind: input, shape index: {}]
  %s1 = inlined_call_operand.hbm [shape: f32[32,32], index: 1, kind: input, shape index: {}]
  %s2 = inlined_call_operand.vmem [shape: f32[1,32], index: 2, kind: input, shape index: {}]
  %s3 = inlined_call_operand.hbm [shape: f32[32,128], index: 3, kind: input, shape index: {}]
  %s4 = inlined_call_operand.vmem [shape: f32[1,128], index: 4, kind: input, shape index: {}]
  %s5 = inlined_call_operand.hbm [shape: f32[16,128], index: 5, kind: output, shape index: {}]
  %s6 = sld [smem:[#allocation0]]
  $region46: #{tpu_custom_call.1} parent=0
    _
  %s8 = ssub.s32 1, %s6
  %s9 = scalar_select 0, %s8, %s6
  $region1: #{tpu_custom_call.1} parent=0
    #allocation3 [shape = 'u8[8192]{0}', space=vmem, size = 0x2000, scoped, tag = 'input window, operand 0, single buffered']
    #allocation4 [shape = 's32[1]{0}', space=sflag, size = 0x4, scoped, tag = 'scoped memory for tpu_custom_call.1']
    #allocation5 [shape = 's32[1]{0}', space=sflag, size = 0x4, scoped, tag = 'scoped memory for tpu_custom_call.1']
    #allocation6 [shape = 'u8[16384]{0}', space=vmem, size = 0x4000, scoped, tag = 'input window, operand 1, single buffered']
    #allocation7 [shape = 's32[1]{0}', space=sflag, size = 0x4, scoped, tag = 'scoped memory for tpu_custom_call.1']
    #allocation8 [shape = 'u8[16384]{0}', space=vmem, size = 0x4000, scoped, tag = 'input window, operand 3, single buffered']
    #allocation9 [shape = 'u8[8192]{0}', space=vmem, size = 0x2000, scoped, tag = 'output window, operand 0, single buffered']
    %10 = vsyncpa [#allocation4], 0
    %11 = vsyncpa [#allocation7], 0
    %12 = vsyncpa [#allocation5], 0
    // Predicated region
    $region2: #{tpu_custom_call.1} parent=1 // pred_check
      _
    $region3: #{tpu_custom_call.1} parent=1 // pred_check_branch
      %14 = sbr.rel (0) target = $region5
    $region4: #{tpu_custom_call.1} parent=1 // pred_region
      %s16 = ssub.s32 256, 256
      %17 = vsyncadd [#allocation4], %s16
      %s18 = sshll.u32 [#allocation3], 4
      %s19 = int_to_ptr.vmem [resolvable:$true] %s18
      %24 = dma.hbm_to_vmem [thread:$0]  %s0, 256, %s19, [#allocation4], 128, 128, 8
    $region5: #{tpu_custom_call.1} parent=1 // pred_fallthru
      _
    // Predicated region
    $region6: #{tpu_custom_call.1} parent=1 // pred_check
      _
    $region7: #{tpu_custom_call.1} parent=1 // pred_check_branch
      %26 = sbr.rel (0) target = $region9
    $region8: #{tpu_custom_call.1} parent=1 // pred_region
      %s28 = ssub.s32 512, 512
      %29 = vsyncadd [#allocation7], %s28
      %s30 = sshll.u32 [#allocation6], 4
      %s31 = int_to_ptr.vmem [resolvable:$true] %s30
      %36 = dma.hbm_to_vmem [thread:$0]  %s1, 512, %s31, [#allocation7], 128, 128, 8
    $region9: #{tpu_custom_call.1} parent=1 // pred_fallthru
      _
    // Predicated region
    $region10: #{tpu_custom_call.1} parent=1 // pred_check
      _
    $region11: #{tpu_custom_call.1} parent=1 // pred_check_branch
      %38 = sbr.rel (0) target = $region13
    $region12: #{tpu_custom_call.1} parent=1 // pred_region
      _
    $region13: #{tpu_custom_call.1} parent=1 // pred_fallthru
      _
    // Predicated region
    $region14: #{tpu_custom_call.1} parent=1 // pred_check
      _
    $region15: #{tpu_custom_call.1} parent=1 // pred_check_branch
      %40 = sbr.rel (0) target = $region17
    $region16: #{tpu_custom_call.1} parent=1 // pred_region
      %s42 = ssub.s32 512, 512
      %43 = vsyncadd [#allocation7], %s42
      %s44 = sshll.u32 [#allocation8], 4
      %s45 = int_to_ptr.vmem [resolvable:$true] %s44
      %50 = dma.hbm_to_vmem [thread:$0]  %s3, 512, %s45, [#allocation7], 128, 128, 8
    $region17: #{tpu_custom_call.1} parent=1 // pred_fallthru
      _
    // Predicated region
    $region18: #{tpu_custom_call.1} parent=1 // pred_check
      _
    $region19: #{tpu_custom_call.1} parent=1 // pred_check_branch
      %52 = sbr.rel (0) target = $region21
    $region20: #{tpu_custom_call.1} parent=1 // pred_region
      _
    $region21: #{tpu_custom_call.1} parent=1 // pred_fallthru
      _
    // Predicated region
    $region22: #{tpu_custom_call.1} parent=1 // pred_check
      _
    $region23: #{tpu_custom_call.1} parent=1 // pred_check_branch
      %54 = sbr.rel (0) target = $region25
    $region24: #{tpu_custom_call.1} parent=1 // pred_region
      %55 = dma.done [#allocation4], 256
    $region25: #{tpu_custom_call.1} parent=1 // pred_fallthru
      _
    // Predicated region
    $region26: #{tpu_custom_call.1} parent=1 // pred_check
      _
    $region27: #{tpu_custom_call.1} parent=1 // pred_check_branch
      %57 = sbr.rel (0) target = $region29
    $region28: #{tpu_custom_call.1} parent=1 // pred_region
      %58 = dma.done [#allocation7], 512
    $region29: #{tpu_custom_call.1} parent=1 // pred_fallthru
      _
    // Predicated region
    $region30: #{tpu_custom_call.1} parent=1 // pred_check
      _
    $region31: #{tpu_custom_call.1} parent=1 // pred_check_branch
      %60 = sbr.rel (0) target = $region33
    $region32: #{tpu_custom_call.1} parent=1 // pred_region
      %61 = dma.done [#allocation7], 512
    $region33: #{tpu_custom_call.1} parent=1 // pred_fallthru
      _
    %p62 = scmp.eq.s32.totalorder 0, 0
    // Predicated region
    $region34: #{tpu_custom_call.1} parent=1 // pred_check
      %p63 = pneg %p62
    $region35: #{tpu_custom_call.1} parent=1 // pred_check_branch
      %65 = sbr.rel (%p63) target = $region37
    $region36: #{tpu_custom_call.1} parent=1 // pred_region
      %v66 = vld [vmem:[#allocation3] sm:$0xff]
      %v67 = vld [vmem:[#allocation3 + $0x8] sm:$0xff]
      %v68 = vld [vmem:[#allocation6] sm:$0xff]
      %v69 = vld [vmem:[#allocation6 + $0x8] sm:$0xff]
      %v70 = vld [vmem:[#allocation6 + $0x10] sm:$0xff]
      %v71 = vld [vmem:[#allocation6 + $0x18] sm:$0xff]
      %v72 = vld [vmem:[%s2] sm:$0x1]
      %v74 = vlaneseq
      %v75 = vshrl.u32 %v74, 7
      %v76 = vsub.s32 0, %v75
      %v77 = vrot.slane %v72, %v76
      %vm79 = vcmask 261120
      %v81 = vsel %vm79, %v66, 0
      %v84 = vsel %vm79, %v67, 0
      %86 = vmatprep.subr.mxu0 0.0
      %87 = vmatpush1.msra.mxu0 %v68
      %88 = vmatprep.subr.mxu0 0.0
      %89 = vmatpush1.msra.mxu0 %v69
      %90 = vmatprep.subr.mxu0 0.0
      %91 = vmatpush1.msra.mxu0 %v70
      %92 = vmatprep.subr.mxu0 0.0
      %93 = vmatpush1.msra.mxu0 %v71
      %94 = vmatprep.subr.mxu0 0.0
      %95 = vmatpush1.msra.mxu0 0.0
      %96 = vmatprep.subr.mxu0 0.0
      %97 = vmatpush1.msra.mxu0 0.0
      %98 = vmatprep.subr.mxu0 0.0
      %99 = vmatpush1.msra.mxu0 0.0
      %100 = vmatprep.subr.mxu0 0.0
      %101 = vmatpush1.msra.mxu0 0.0
      %102 = vmatprep.subr.mxu0 0.0
      %103 = vmatpush1.msra.mxu0 0.0
      %104 = vmatprep.subr.mxu0 0.0
      %105 = vmatpush1.msra.mxu0 0.0
      %106 = vmatprep.subr.mxu0 0.0
      %107 = vmatpush1.msra.mxu0 0.0
      %108 = vmatprep.subr.mxu0 0.0
      %109 = vmatpush1.msra.mxu0 0.0
      %110 = vmatprep.subr.mxu0 0.0
      %111 = vmatpush1.msra.mxu0 0.0
      %112 = vmatprep.subr.mxu0 0.0
      %113 = vmatpush1.msra.mxu0 0.0
      %114 = vmatprep.subr.mxu0 0.0
      %115 = vmatpush1.msra.mxu0 0.0
      %116 = vmatprep.subr.mxu0 0.0
      %117 = vmatpush1.msra.mxu0 0.0
      %118 = vmatprep.subr.mxu0 0.0
      %119 = vmatpush1.msra.mxu0 0.0
      %120 = vmatprep.subr.mxu0 0.0
      %121 = vmatpush1.msra.mxu0 0.0
      %122 = vmatprep.subr.mxu0 0.0
      %123 = vmatpush1.msra.mxu0 0.0
      %124 = vmatprep.subr.mxu0 0.0
      %125 = vmatpush1.msra.mxu0 0.0
      %126 = vmatprep.subr.mxu0 0.0
      %127 = vmatpush1.msra.mxu0 0.0
      %128 = vmatprep.subr.mxu0 0.0
      %129 = vmatpush1.msra.mxu0 0.0
      %130 = vmatprep.subr.mxu0 0.0
      %131 = vmatpush1.msra.mxu0 0.0
      %132 = vmatprep.subr.mxu0 0.0
      %133 = vmatpush1.msra.mxu0 0.0
      %134 = vmatprep.subr.mxu0 0.0
      %135 = vmatpush1.msra.mxu0 0.0
      %136 = vmatprep.subr.mxu0 0.0
      %137 = vmatpush1.msra.mxu0 0.0
      %138 = vmatprep.subr.mxu0 0.0
      %139 = vmatpush1.msra.mxu0 0.0
      %140 = vmatprep.subr.mxu0 0.0
      %141 = vmatpush1.msra.mxu0 0.0
      %142 = vmatprep.subr.mxu0 0.0
      %143 = vmatpush1.msra.mxu0 0.0
      %144 = vmatprep.subr.mxu0 0.0
      %145 = vmatpush1.msra.mxu0 0.0
      %146 = vmatprep.subr.mxu0 0.0
      %147 = vmatpush1.msra.mxu0 0.0
      %148 = vmatprep.subr.mxu0 0.0
      %149 = vmatpush1.msra.mxu0 0.0
      %150 = vmatprep.mubr.f32.mxu0 0.0
      %151 = vmatmul.mubr.f32.gmra.mrb[0].mxu0 %v81
      %v152 = vpop.f32.mrb[0].mxu0
      %v153 = vadd.f32 %v77, %v152
      %v154 = vpop.f32.mrb[0].mxu0
      %155 = vmatprep.mubr.f32.mxu0 0.0
      %156 = vmatmul.mubr.f32.gmra.mrb[0].mxu0 %v84
      %v157 = vpop.f32.mrb[0].mxu0
      %v158 = vadd.f32 %v77, %v157
      %v159 = vpop.f32.mrb[0].mxu0
      %160 = vdwg.mxu0
      %161 = vst.msk [vmem:[#allocation2] sm:$0xff] %vm79, %v153
      %162 = vst.msk [vmem:[#allocation2 + $0x8] sm:$0xff] %vm79, %v158
    $region37: #{tpu_custom_call.1} parent=1 // pred_fallthru
      _
    %v163 = vld [vmem:[#allocation2] sm:$0xff]
    %v164 = vld [vmem:[#allocation2 + $0x8] sm:$0xff]
    %v165 = vld [vmem:[#allocation8] sm:$0xff]
    %v166 = vld [vmem:[#allocation8 + $0x8] sm:$0xff]
    %v167 = vld [vmem:[#allocation8 + $0x10] sm:$0xff]
    %v168 = vld [vmem:[#allocation8 + $0x18] sm:$0xff]
    %v169 = vld [vmem:[%s4] sm:$0x1]
    %v171 = vlaneseq
    %v172 = vshrl.u32 %v171, 7
    %v173 = vsub.s32 0, %v172
    %v174 = vrot.slane %v169, %v173
    %vm176 = vcmask 261120
    %v178 = vsel %vm176, %v163, 0
    %v181 = vsel %vm176, %v164, 0
    %183 = vmatprep.subr.mxu0 0.0
    %184 = vmatpush1.msra.mxu0 %v165
    %185 = vmatprep.subr.mxu0 0.0
    %186 = vmatpush1.msra.mxu0 %v166
    %187 = vmatprep.subr.mxu0 0.0
    %188 = vmatpush1.msra.mxu0 %v167
    %189 = vmatprep.subr.mxu0 0.0
    %190 = vmatpush1.msra.mxu0 %v168
    %191 = vmatprep.subr.mxu0 0.0
    %192 = vmatpush1.msra.mxu0 0.0
    %193 = vmatprep.subr.mxu0 0.0
    %194 = vmatpush1.msra.mxu0 0.0
    %195 = vmatprep.subr.mxu0 0.0
    %196 = vmatpush1.msra.mxu0 0.0
    %197 = vmatprep.subr.mxu0 0.0
    %198 = vmatpush1.msra.mxu0 0.0
    %199 = vmatprep.subr.mxu0 0.0
    %200 = vmatpush1.msra.mxu0 0.0
    %201 = vmatprep.subr.mxu0 0.0
    %202 = vmatpush1.msra.mxu0 0.0
    %203 = vmatprep.subr.mxu0 0.0
    %204 = vmatpush1.msra.mxu0 0.0
    %205 = vmatprep.subr.mxu0 0.0
    %206 = vmatpush1.msra.mxu0 0.0
    %207 = vmatprep.subr.mxu0 0.0
    %208 = vmatpush1.msra.mxu0 0.0
    %209 = vmatprep.subr.mxu0 0.0
    %210 = vmatpush1.msra.mxu0 0.0
    %211 = vmatprep.subr.mxu0 0.0
    %212 = vmatpush1.msra.mxu0 0.0
    %213 = vmatprep.subr.mxu0 0.0
    %214 = vmatpush1.msra.mxu0 0.0
    %215 = vmatprep.subr.mxu0 0.0
    %216 = vmatpush1.msra.mxu0 0.0
    %217 = vmatprep.subr.mxu0 0.0
    %218 = vmatpush1.msra.mxu0 0.0
    %219 = vmatprep.subr.mxu0 0.0
    %220 = vmatpush1.msra.mxu0 0.0
    %221 = vmatprep.subr.mxu0 0.0
    %222 = vmatpush1.msra.mxu0 0.0
    %223 = vmatprep.subr.mxu0 0.0
    %224 = vmatpush1.msra.mxu0 0.0
    %225 = vmatprep.subr.mxu0 0.0
    %226 = vmatpush1.msra.mxu0 0.0
    %227 = vmatprep.subr.mxu0 0.0
    %228 = vmatpush1.msra.mxu0 0.0
    %229 = vmatprep.subr.mxu0 0.0
    %230 = vmatpush1.msra.mxu0 0.0
    %231 = vmatprep.subr.mxu0 0.0
    %232 = vmatpush1.msra.mxu0 0.0
    %233 = vmatprep.subr.mxu0 0.0
    %234 = vmatpush1.msra.mxu0 0.0
    %235 = vmatprep.subr.mxu0 0.0
    %236 = vmatpush1.msra.mxu0 0.0
    %237 = vmatprep.subr.mxu0 0.0
    %238 = vmatpush1.msra.mxu0 0.0
    %239 = vmatprep.subr.mxu0 0.0
    %240 = vmatpush1.msra.mxu0 0.0
    %241 = vmatprep.subr.mxu0 0.0
    %242 = vmatpush1.msra.mxu0 0.0
    %243 = vmatprep.subr.mxu0 0.0
    %244 = vmatpush1.msra.mxu0 0.0
    %245 = vmatprep.subr.mxu0 0.0
    %246 = vmatpush1.msra.mxu0 0.0
    %247 = vmatprep.mubr.f32.mxu0 0.0
    %248 = vmatmul.mubr.f32.gmra.mrb[0].mxu0 %v178
    %v249 = vpop.f32.mrb[0].mxu0
    %v250 = vadd.f32 %v174, %v249
    %v251 = vpop.f32.mrb[0].mxu0
    %252 = vmatprep.mubr.f32.mxu0 0.0
    %253 = vmatmul.mubr.f32.gmra.mrb[0].mxu0 %v181
    %v254 = vpop.f32.mrb[0].mxu0
    %v255 = vadd.f32 %v174, %v254
    %v256 = vpop.f32.mrb[0].mxu0
    %257 = vdwg.mxu0
    %258 = vst [vmem:[#allocation9] sm:$0xff] %v250
    %259 = vst [vmem:[#allocation9 + $0x8] sm:$0xff] %v255
    // Predicated region
    $region38: #{tpu_custom_call.1} parent=1 // pred_check
      _
    $region39: #{tpu_custom_call.1} parent=1 // pred_check_branch
      %261 = sbr.rel (0) target = $region41
    $region40: #{tpu_custom_call.1} parent=1 // pred_region
      %s263 = ssub.s32 256, 256
      %264 = vsyncadd [#allocation5], %s263
      %s265 = sshll.u32 [#allocation9], 4
      %s266 = int_to_ptr.vmem [resolvable:$true] %s265
      %271 = dma.vmem_to_hbm [thread:$0]  %s266, 256, %s5, [#allocation5], 128, 128, 8
    $region41: #{tpu_custom_call.1} parent=1 // pred_fallthru
      _
    // Predicated region
    $region42: #{tpu_custom_call.1} parent=1 // pred_check
      _
    $region43: #{tpu_custom_call.1} parent=1 // pred_check_branch
      %273 = sbr.rel (0) target = $region45
    $region44: #{tpu_custom_call.1} parent=1 // pred_region
      %274 = dma.done [#allocation5], 256
    $region45: #{tpu_custom_call.1} parent=1 // pred_fallthru
      _
    %275 = vsyncpa [#allocation4], 1
    %276 = vsyncpa [#allocation7], 1
    %277 = vsyncpa [#allocation5], 1

</llo_original>
